<compile_context>
chip_gen: v7x
topology: tpu7x:2x2x1
jax: 0.10.0
libtpu: 0.0.40
codegen_flags: <defaults>
</compile_context>

<pallas_src>
import functools
import math

import jax
import jax.numpy as jnp
from jax import lax
from jax.experimental import pallas as pl
from jax.experimental.pallas import tpu as pltpu


# Contract the minor dim of both operands:  out[m, n] = sum_k lhs[m, k] rhs[n, k]
# (i.e. A @ B^T).  Same dimension numbers as the TPU flash-attention q@k^T.
_NT_DIMS = (((1,), (1,)), ((), ()))


def _default_compute_dtype():
    """bf16 activations on v6e / v7x (bf16 VPU+EUP); f32 everywhere else."""
    try:
        kind = jax.devices()[0].device_kind.lower()
    except Exception:
        return jnp.float32
    if any(tag in kind for tag in ("v6", "v7", "trillium")):
        return jnp.bfloat16
    return jnp.float32


def _choose_tile(batch, block_batch):
    """Pick the batch tile (lane axis inside the kernel).

    * batch <= 256: single whole-array block (block shape == full dims).
    * otherwise: lane-dense multiple of 128, at least 2 grid steps (both
      TensorCores on v7x get work), capped at block_batch.
    """
    if batch <= 256:
        return batch
    half = -(-batch // 2)                      # ceil(batch / 2)
    tb = -(-half // 128) * 128                 # round up to a multiple of 128
    cap = max(128, (block_batch // 128) * 128)
    return min(tb, cap)


def _uncertainty_kernel(n_layers, compute_dtype, *refs):
    """One batch-tile of the UncertaintyNN forward.

    Ref order:
      state_ref   [TB, S]      (batch-major, as stored in HBM)
      action_ref  [1, TB]      (feature-major; free reshape in the wrapper)
      (w_ref [feat, in_prev], wa_ref [feat, 1], b_ref [feat, 1]) * n_layers
      head_wx_ref [F_last, 1]  (or [1, S] when n_layers == 0)
      head_wa_ref [1, 1]       (only present when n_layers == 0)
      head_b_ref  [1, 1]
      out_ref     [1, TB]
    """
    idx = 0
    state_ref = refs[idx]; idx += 1
    action_ref = refs[idx]; idx += 1
    layer_refs = refs[idx: idx + 3 * n_layers]; idx += 3 * n_layers
    head_wx_ref = refs[idx]; idx += 1
    head_wa_ref = None
    if n_layers == 0:
        head_wa_ref = refs[idx]; idx += 1
    head_b_ref = refs[idx]; idx += 1
    out_ref = refs[idx]

    a = action_ref[...].astype(jnp.float32)          # [1, TB]
    x_bm = state_ref[...].astype(compute_dtype)      # [TB, S] batch-major

    x = None                                         # feature-major activations
    for i in range(n_layers):
        w_ref, wa_ref, b_ref = layer_refs[3 * i: 3 * i + 3]
        # torch: x = tanh(Linear(cat([x, a], dim=1)))  ==  tanh(W_x @ x + w_a*a + b)
        if i == 0:
            # NT matmul folds the batch-major -> feature-major relayout into the
            # MXU call (no explicit transpose, no wrapper HBM pass).
            h = lax.dot_general(w_ref[...], x_bm, _NT_DIMS,
                                preferred_element_type=jnp.float32)      # [F0, TB]
        else:
            h = jnp.dot(w_ref[...], x, preferred_element_type=jnp.float32)
        # Action term (K = 1): VPU broadcast outer product; bias broadcast. f32.
        h = h + wa_ref[...] * a + b_ref[...]
        # tanh on the compute dtype (bf16 on v6e/v7x -> EUP throughput win).
        x = jnp.tanh(h.astype(compute_dtype))                            # [Fi, TB]

    if n_layers > 0:
        # Head (N = 1 in torch): VPU multiply + sublane (XLU) reduction in f32,
        # avoiding a degenerate N=1 MXU call; output stays lane-dense.
        logits = jnp.sum(x * head_wx_ref[...], axis=0, keepdims=True)    # [1, TB]
    else:
        # Head sees cat(state, action): NT matmul against batch-major state
        # plus the action column.
        logits = lax.dot_general(head_wx_ref[...].astype(compute_dtype), x_bm,
                                 _NT_DIMS, preferred_element_type=jnp.float32)
        logits = logits + head_wa_ref[...] * a
    logits = logits + head_b_ref[...]

    # sigmoid(z) = 0.5 * tanh(z / 2) + 0.5  — one EUP op, exact at the tails.
    out_ref[...] = 0.5 * jnp.tanh(0.5 * logits) + 0.5


def uncertainty_nn_forward(state, action, params, *, block_batch=2048,
                           compute_dtype=None):
    """Fused UncertaintyNN forward as a single Pallas call.

    params:
      "layers" : list of (W [feat, in_prev], Wa [feat, 1], b [feat, 1])
      "head_wx": [F_last, 1] (or [1, S] if no hidden layers)
      "head_wa": [1, 1] (only used if no hidden layers), "head_b": [1, 1]
    Returns sigmoid output of shape [batch, 1], float32.
    """
    if compute_dtype is None:
        compute_dtype = _default_compute_dtype()

    batch, state_size = state.shape
    n_layers = len(params["layers"])

    # action [B,1] -> [1,B]: contiguous, metadata-only reshape (no HBM pass).
    action_row = action.astype(jnp.float32).reshape(1, batch)

    tb = _choose_tile(batch, block_batch)
    grid = (pl.cdiv(batch, tb),)   # partial edge block handled by Pallas

    flat_inputs = [state, action_row]
    in_specs = [
        pl.BlockSpec((tb, state_size), lambda i: (i, 0)),   # batch-major state tile
        pl.BlockSpec((1, tb), lambda i: (0, i)),            # feature-major action
    ]
    const_map = lambda i: (0, 0)   # weights: same block every step -> VMEM resident
    for (w, wa, b) in params["layers"]:
        flat_inputs += [w.astype(compute_dtype), wa, b]
        in_specs += [
            pl.BlockSpec(w.shape, const_map),
            pl.BlockSpec(wa.shape, const_map),
            pl.BlockSpec(b.shape, const_map),
        ]
    flat_inputs.append(params["head_wx"])
    in_specs.append(pl.BlockSpec(params["head_wx"].shape, const_map))
    if n_layers == 0:
        flat_inputs.append(params["head_wa"])
        in_specs.append(pl.BlockSpec(params["head_wa"].shape, const_map))
    flat_inputs.append(params["head_b"])
    in_specs.append(pl.BlockSpec(params["head_b"].shape, const_map))

    # Advisory cost estimate for XLA's scheduler.
    flops = 0
    transcendentals = 0
    in_prev = state_size
    for (w, _, _) in params["layers"]:
        feat = w.shape[0]
        flops += 2 * batch * (in_prev + 1) * feat
        transcendentals += batch * feat
        in_prev = feat
    head_in = in_prev + (1 if n_layers == 0 else 0)
    flops += 2 * batch * head_in
    transcendentals += batch   # sigmoid-as-tanh
    param_bytes = sum(int(a.size) * a.dtype.itemsize
                      for a in jax.tree_util.tree_leaves(params))
    bytes_accessed = (batch * state_size * state.dtype.itemsize
                      + batch * 4      # action row (f32)
                      + batch * 4      # output (f32)
                      + param_bytes)
    cost = pl.CostEstimate(flops=int(flops),
                           transcendentals=int(transcendentals),
                           bytes_accessed=int(bytes_accessed))

    kernel = functools.partial(_uncertainty_kernel, n_layers, compute_dtype)

    out_row = pl.pallas_call(
        kernel,
        out_shape=jax.ShapeDtypeStruct((1, batch), jnp.float32),
        grid=grid,
        in_specs=in_specs,
        out_specs=pl.BlockSpec((1, tb), lambda i: (0, i)),
        compiler_params=pltpu.CompilerParams(
            dimension_semantics=("parallel",),   # shards batch tiles across TCs
        ),
        cost_estimate=cost,
    )(*flat_inputs)

    return out_row.reshape(batch, 1)   # contiguous [1,B] -> [B,1]: free reshape


def init_params(key, state_size, action_size, layers_features):
    """Deterministic init matching nn.Linear's U(-1/sqrt(fan_in), 1/sqrt(fan_in)).

    PyTorch weight is [out, in]; we keep that orientation (good for feature-major
    math) and split off the action column:
      W: [feat, in_prev], Wa: [feat, 1], b: [feat, 1].
    """
    assert action_size == 1  # the PyTorch module hard-codes action_size = 1
    params = {"layers": []}
    in_size = state_size
    for feat in layers_features:
        fan_in = in_size + action_size
        bound = 1.0 / math.sqrt(fan_in)
        key, kw, kb = jax.random.split(key, 3)
        w_full = jax.random.uniform(kw, (feat, fan_in), minval=-bound,
                                    maxval=bound, dtype=jnp.float32)
        b = jax.random.uniform(kb, (feat, 1), minval=-bound, maxval=bound,
                               dtype=jnp.float32)
        params["layers"].append((w_full[:, :in_size], w_full[:, in_size:], b))
        in_size = feat

    head_in = layers_features[-1] if layers_features else state_size + action_size
    bound = 1.0 / math.sqrt(head_in)
    key, kw, kb = jax.random.split(key, 3)
    head_w = jax.random.uniform(kw, (1, head_in), minval=-bound, maxval=bound,
                                dtype=jnp.float32)
    head_b = jax.random.uniform(kb, (1, 1), minval=-bound, maxval=bound,
                                dtype=jnp.float32)
    if layers_features:
        params["head_wx"] = jnp.transpose(head_w)            # [F_last, 1] column
        params["head_wa"] = jnp.zeros((1, 1), jnp.float32)   # unused
    else:
        # head sees cat(state, action): keep the state part as a row for the
        # in-kernel NT matmul against the batch-major state tile.
        params["head_wx"] = head_w[:, :state_size]           # [1, S]
        params["head_wa"] = head_w[:, state_size:]           # [1, 1]
    params["head_b"] = head_b
    return params


def reference_forward(state, action, params):
    """Pure-JAX f32 reference mirroring the PyTorch forward."""
    batch = state.shape[0]
    x = state.astype(jnp.float32)
    a = action.astype(jnp.float32).reshape(batch, 1)
    for (w, wa, b) in params["layers"]:
        x = jnp.tanh(x @ w.T + a @ wa.T + b.T)
    if params["layers"]:
        logits = x @ params["head_wx"] + params["head_b"]
    else:
        logits = x @ params["head_wx"].T + a @ params["head_wa"].T + params["head_b"]
    return jax.nn.sigmoid(logits)


if __name__ == "__main__":
    # Config mirrors: UncertaintyNN(state_shape=(B, 8), action_shape=(B, 1),
    #                               layers_type=['fc', 'fc'], layers_features=[32, 32])
    batch = 2
    state_size = 8
    action_size = 1
    layers_features = [32, 32]

    compute_dtype = _default_compute_dtype()
    is_bf16 = (compute_dtype == jnp.bfloat16)
    tol = 2e-2 if is_bf16 else 5e-3

    key = jax.random.PRNGKey(0)
    key, ks, ka, kp = jax.random.split(key, 4)

    state = jax.random.normal(ks, (batch, state_size), dtype=jnp.float32)
    action = jax.random.randint(ka, (batch, action_size), 0, 4).astype(jnp.float32)
    params = init_params(kp, state_size, action_size, layers_features)

    out = jax.block_until_ready(uncertainty_nn_forward(state, action, params))
    ref = reference_forward(state, action, params)
    assert out.shape == (batch, 1), out.shape
    assert jnp.allclose(out, ref, atol=tol, rtol=tol), (out, ref)

    # Larger batch: exercises >=2 lane-dense grid steps (both TCs on v7x) and the
    # partial edge block (1000 = 512 + 488), with no wrapper pad/transpose pass.
    big_batch = 1000
    key, ks2, ka2 = jax.random.split(key, 3)
    state2 = jax.random.normal(ks2, (big_batch, state_size), dtype=jnp.float32)
    action2 = jax.random.randint(ka2, (big_batch, action_size), 0, 4).astype(jnp.float32)
    out2 = jax.block_until_ready(uncertainty_nn_forward(state2, action2, params))
    ref2 = reference_forward(state2, action2, params)
    assert out2.shape == (big_batch, 1), out2.shape
    assert jnp.allclose(out2, ref2, atol=tol, rtol=tol)

    # Head-only edge case (layers_type == []): head sees cat(state, action).
    params0 = init_params(jax.random.PRNGKey(1), state_size, action_size, [])
    out0 = jax.block_until_ready(uncertainty_nn_forward(state, action, params0))
    ref0 = reference_forward(state, action, params0)
    assert out0.shape == (batch, 1), out0.shape
    assert jnp.allclose(out0, ref0, atol=tol, rtol=tol)

    print("KERNEL_OK")
</pallas_src>

<mosaic_0001>
module attributes {stable_mosaic.version = 11 : i64} {
  func.func @_uncertainty_kernel(%arg0: i32, %arg1: memref<2x8xf32, #tpu.memory_space<vmem>>, %arg2: memref<1x2xf32, #tpu.memory_space<vmem>>, %arg3: memref<32x8xf32, #tpu.memory_space<vmem>>, %arg4: memref<32x1xf32, #tpu.memory_space<vmem>>, %arg5: memref<32x1xf32, #tpu.memory_space<vmem>>, %arg6: memref<32x32xf32, #tpu.memory_space<vmem>>, %arg7: memref<32x1xf32, #tpu.memory_space<vmem>>, %arg8: memref<32x1xf32, #tpu.memory_space<vmem>>, %arg9: memref<32x1xf32, #tpu.memory_space<vmem>>, %arg10: memref<1x1xf32, #tpu.memory_space<vmem>>, %arg11: memref<1x2xf32, #tpu.memory_space<vmem>>) attributes {dimension_semantics = [#tpu.dimension_semantics<parallel>], iteration_bounds = array<i64: 1>, scalar_prefetch = 0 : i64, scratch_operands = 0 : i64, tpu.core_type = #tpu.core_type<tc>, window_params = [{transform_indices = @transform_0, window_bounds = array<i64: 2, 8>}, {transform_indices = @transform_1, window_bounds = array<i64: 1, 2>}, {pipeline_mode = #tpu.pipeline_mode<synchronous>, transform_indices = @transform_2, window_bounds = array<i64: 32, 8>}, {pipeline_mode = #tpu.pipeline_mode<synchronous>, transform_indices = @transform_3, window_bounds = array<i64: 32, 1>}, {pipeline_mode = #tpu.pipeline_mode<synchronous>, transform_indices = @transform_4, window_bounds = array<i64: 32, 1>}, {pipeline_mode = #tpu.pipeline_mode<synchronous>, transform_indices = @transform_5, window_bounds = array<i64: 32, 32>}, {pipeline_mode = #tpu.pipeline_mode<synchronous>, transform_indices = @transform_6, window_bounds = array<i64: 32, 1>}, {pipeline_mode = #tpu.pipeline_mode<synchronous>, transform_indices = @transform_7, window_bounds = array<i64: 32, 1>}, {pipeline_mode = #tpu.pipeline_mode<synchronous>, transform_indices = @transform_8, window_bounds = array<i64: 32, 1>}, {pipeline_mode = #tpu.pipeline_mode<synchronous>, transform_indices = @transform_9, window_bounds = array<i64: 1, 1>}, {transform_indices = @transform_10, window_bounds = array<i64: 1, 2>}]} {
    %c0 = arith.constant 0 : index
    %c0_0 = arith.constant 0 : index
    %0 = vector.load %arg2[%c0, %c0_0] : memref<1x2xf32, #tpu.memory_space<vmem>>, vector<1x2xf32>
    %c0_1 = arith.constant 0 : index
    %c0_2 = arith.constant 0 : index
    %1 = vector.load %arg1[%c0_1, %c0_2] : memref<2x8xf32, #tpu.memory_space<vmem>>, vector<2x8xf32>
    %c0_3 = arith.constant 0 : index
    %c0_4 = arith.constant 0 : index
    %2 = vector.load %arg3[%c0_3, %c0_4] : memref<32x8xf32, #tpu.memory_space<vmem>>, vector<32x8xf32>
    %cst = arith.constant dense<0.000000e+00> : vector<32x2xf32>
    %3 = tpu.matmul %2, %1, %cst {dimension_numbers = #tpu.dot_dimension_numbers<[1], [1], [0], [0], [0, 0, 1, 0], [], []>} : vector<32x8xf32>, vector<2x8xf32>, vector<32x2xf32> -> vector<32x2xf32>
    %c0_5 = arith.constant 0 : index
    %c0_6 = arith.constant 0 : index
    %4 = vector.load %arg4[%c0_5, %c0_6] : memref<32x1xf32, #tpu.memory_space<vmem>>, vector<32x1xf32>
    %5 = vector.broadcast %4 : vector<32x1xf32> to vector<32x2xf32>
    %6 = vector.broadcast %0 : vector<1x2xf32> to vector<32x2xf32>
    %7 = arith.mulf %5, %6 : vector<32x2xf32>
    %8 = arith.addf %3, %7 : vector<32x2xf32>
    %c0_7 = arith.constant 0 : index
    %c0_8 = arith.constant 0 : index
    %9 = vector.load %arg5[%c0_7, %c0_8] : memref<32x1xf32, #tpu.memory_space<vmem>>, vector<32x1xf32>
    %10 = vector.broadcast %9 : vector<32x1xf32> to vector<32x2xf32>
    %11 = arith.addf %8, %10 : vector<32x2xf32>
    %12 = math.tanh %11 : vector<32x2xf32>
    %c0_9 = arith.constant 0 : index
    %c0_10 = arith.constant 0 : index
    %13 = vector.load %arg6[%c0_9, %c0_10] : memref<32x32xf32, #tpu.memory_space<vmem>>, vector<32x32xf32>
    %cst_11 = arith.constant dense<0.000000e+00> : vector<32x2xf32>
    %14 = tpu.matmul %13, %12, %cst_11 {dimension_numbers = #tpu.dot_dimension_numbers<[1], [0], [0], [1], [0, 0, 1, 1], [], []>} : vector<32x32xf32>, vector<32x2xf32>, vector<32x2xf32> -> vector<32x2xf32>
    %c0_12 = arith.constant 0 : index
    %c0_13 = arith.constant 0 : index
    %15 = vector.load %arg7[%c0_12, %c0_13] : memref<32x1xf32, #tpu.memory_space<vmem>>, vector<32x1xf32>
    %16 = vector.broadcast %15 : vector<32x1xf32> to vector<32x2xf32>
    %17 = vector.broadcast %0 : vector<1x2xf32> to vector<32x2xf32>
    %18 = arith.mulf %16, %17 : vector<32x2xf32>
    %19 = arith.addf %14, %18 : vector<32x2xf32>
    %c0_14 = arith.constant 0 : index
    %c0_15 = arith.constant 0 : index
    %20 = vector.load %arg8[%c0_14, %c0_15] : memref<32x1xf32, #tpu.memory_space<vmem>>, vector<32x1xf32>
    %21 = vector.broadcast %20 : vector<32x1xf32> to vector<32x2xf32>
    %22 = arith.addf %19, %21 : vector<32x2xf32>
    %23 = math.tanh %22 : vector<32x2xf32>
    %c0_16 = arith.constant 0 : index
    %c0_17 = arith.constant 0 : index
    %24 = vector.load %arg9[%c0_16, %c0_17] : memref<32x1xf32, #tpu.memory_space<vmem>>, vector<32x1xf32>
    %25 = vector.broadcast %24 : vector<32x1xf32> to vector<32x2xf32>
    %26 = arith.mulf %23, %25 : vector<32x2xf32>
    %cst_18 = arith.constant dense<0.000000e+00> : vector<2xf32>
    %27 = vector.multi_reduction <add>, %26, %cst_18 [0] : vector<32x2xf32> to vector<2xf32>
    %28 = vector.shape_cast %27 : vector<2xf32> to vector<1x2xf32>
    %c0_19 = arith.constant 0 : index
    %c0_20 = arith.constant 0 : index
    %29 = vector.load %arg10[%c0_19, %c0_20] : memref<1x1xf32, #tpu.memory_space<vmem>>, vector<1x1xf32>
    %30 = vector.broadcast %29 : vector<1x1xf32> to vector<1x2xf32>
    %31 = arith.addf %28, %30 : vector<1x2xf32>
    %cst_21 = arith.constant 5.000000e-01 : f32
    %32 = vector.broadcast %cst_21 : f32 to vector<1x2xf32>
    %33 = arith.mulf %32, %31 : vector<1x2xf32>
    %34 = math.tanh %33 : vector<1x2xf32>
    %cst_22 = arith.constant 5.000000e-01 : f32
    %35 = vector.broadcast %cst_22 : f32 to vector<1x2xf32>
    %36 = arith.mulf %35, %34 : vector<1x2xf32>
    %cst_23 = arith.constant 5.000000e-01 : f32
    %37 = vector.broadcast %cst_23 : f32 to vector<1x2xf32>
    %38 = arith.addf %36, %37 : vector<1x2xf32>
    %c0_24 = arith.constant 0 : index
    %c0_25 = arith.constant 0 : index
    %39 = vector.load %arg11[%c0_24, %c0_25] : memref<1x2xf32, #tpu.memory_space<vmem>>, vector<1x2xf32>
    tpu.vector_store %arg11[%c0_24, %c0_25], %38 {strides = array<i32>} : memref<1x2xf32, #tpu.memory_space<vmem>>, vector<1x2xf32>,
    return
  }
  func.func @transform_0(%arg0: i32) -> (i32, i32) {
    %c0_i32 = arith.constant 0 : i32
    %c0_i32_0 = arith.constant 0 : i32
    return %arg0, %c0_i32 : i32, i32
  }
  func.func @transform_1(%arg0: i32) -> (i32, i32) {
    %c0_i32 = arith.constant 0 : i32
    %c0_i32_0 = arith.constant 0 : i32
    return %c0_i32, %arg0 : i32, i32
  }
  func.func @transform_2(%arg0: i32) -> (i32, i32) {
    %c0_i32 = arith.constant 0 : i32
    %c0_i32_0 = arith.constant 0 : i32
    %c0_i32_1 = arith.constant 0 : i32
    return %c0_i32, %c0_i32_0 : i32, i32
  }
  func.func @transform_3(%arg0: i32) -> (i32, i32) {
    %c0_i32 = arith.constant 0 : i32
    %c0_i32_0 = arith.constant 0 : i32
    %c0_i32_1 = arith.constant 0 : i32
    return %c0_i32, %c0_i32_0 : i32, i32
  }
  func.func @transform_4(%arg0: i32) -> (i32, i32) {
    %c0_i32 = arith.constant 0 : i32
    %c0_i32_0 = arith.constant 0 : i32
    %c0_i32_1 = arith.constant 0 : i32
    return %c0_i32, %c0_i32_0 : i32, i32
  }
  func.func @transform_5(%arg0: i32) -> (i32, i32) {
    %c0_i32 = arith.constant 0 : i32
    %c0_i32_0 = arith.constant 0 : i32
    %c0_i32_1 = arith.constant 0 : i32
    return %c0_i32, %c0_i32_0 : i32, i32
  }
  func.func @transform_6(%arg0: i32) -> (i32, i32) {
    %c0_i32 = arith.constant 0 : i32
    %c0_i32_0 = arith.constant 0 : i32
    %c0_i32_1 = arith.constant 0 : i32
    return %c0_i32, %c0_i32_0 : i32, i32
  }
  func.func @transform_7(%arg0: i32) -> (i32, i32) {
    %c0_i32 = arith.constant 0 : i32
    %c0_i32_0 = arith.constant 0 : i32
    %c0_i32_1 = arith.constant 0 : i32
    return %c0_i32, %c0_i32_0 : i32, i32
  }
  func.func @transform_8(%arg0: i32) -> (i32, i32) {
    %c0_i32 = arith.constant 0 : i32
    %c0_i32_0 = arith.constant 0 : i32
    %c0_i32_1 = arith.constant 0 : i32
    return %c0_i32, %c0_i32_0 : i32, i32
  }
  func.func @transform_9(%arg0: i32) -> (i32, i32) {
    %c0_i32 = arith.constant 0 : i32
    %c0_i32_0 = arith.constant 0 : i32
    %c0_i32_1 = arith.constant 0 : i32
    return %c0_i32, %c0_i32_0 : i32, i32
  }
  func.func @transform_10(%arg0: i32) -> (i32, i32) {
    %c0_i32 = arith.constant 0 : i32
    %c0_i32_0 = arith.constant 0 : i32
    return %c0_i32, %arg0 : i32, i32
  }
}

</mosaic_0001>

<llo_original>
// kernel: tpu_custom_call.1
$region0: #{tpu_custom_call.1}
  #allocation0 [shape = 'u32[]', space=smem, size = 0x4, offset = 0x4, fixed_abs, tag = 'smem constant byte address 0x4 - core index']
  #allocation1 [shape = 'u32[144,128]{1,0:T(1,128)}', space=vmem, size = 0x12000, scoped, tag = 'internal scratch']
  #allocation2 [shape = 'f32[1,1]{1,0:T(1,128)S(1)}', space=vmem, size = 0x200, scoped, tag = 'scoped memory for tpu_custom_call.1']
  %s0 = inlined_call_operand.vmem [shape: f32[2,8], index: 0, kind: input, shape index: {}]
  %s1 = inlined_call_operand.vmem [shape: f32[1,2], index: 1, kind: input, shape index: {}]
  %s2 = inlined_call_operand.vmem [shape: f32[32,8], index: 2, kind: input, shape index: {}]
  %s3 = inlined_call_operand.vmem [shape: f32[32,1], index: 3, kind: input, shape index: {}]
  %s4 = inlined_call_operand.vmem [shape: f32[32,1], index: 4, kind: input, shape index: {}]
  %s5 = inlined_call_operand.vmem [shape: f32[32,32], index: 5, kind: input, shape index: {}]
  %s6 = inlined_call_operand.vmem [shape: f32[32,1], index: 6, kind: input, shape index: {}]
  %s7 = inlined_call_operand.vmem [shape: f32[32,1], index: 7, kind: input, shape index: {}]
  %s8 = inlined_call_operand.vmem [shape: f32[32,1], index: 8, kind: input, shape index: {}]
  %s9 = inlined_call_operand.<no memory space> [shape: f32[1,1], index: 9, kind: input, shape index: {}]
  %s10 = inlined_call_operand.hbm [shape: f32[1,2], index: 10, kind: output, shape index: {}]
  %s11 = sld [smem:[#allocation0]]
  $region50: #{tpu_custom_call.1} parent=0
    _
  %s13 = ssub.s32 1, %s11
  %s14 = scalar_select 0, %s13, %s11
  %v15 = vstv %s9
  %16 = vst [vmem:[#allocation2] sm:$0x1] %v15
  $region1: #{tpu_custom_call.1} parent=0
    #allocation3 [shape = 'u8[512]{0}', space=vmem, size = 0x400, scoped, tag = 'output window, operand 0, single buffered']
    #allocation4 [shape = 's32[1]{0}', space=sflag, size = 0x4, scoped, tag = 'scoped memory for tpu_custom_call.1']
    %17 = vsyncpa [#allocation4], 0
    // Predicated region
    $region2: #{tpu_custom_call.1} parent=1 // pred_check
      _
    $region3: #{tpu_custom_call.1} parent=1 // pred_check_branch
      %19 = sbr.rel (0) target = $region5
    $region4: #{tpu_custom_call.1} parent=1 // pred_region
      _
    $region5: #{tpu_custom_call.1} parent=1 // pred_fallthru
      _
    // Predicated region
    $region6: #{tpu_custom_call.1} parent=1 // pred_check
      _
    $region7: #{tpu_custom_call.1} parent=1 // pred_check_branch
      %21 = sbr.rel (0) target = $region9
    $region8: #{tpu_custom_call.1} parent=1 // pred_region
      _
    $region9: #{tpu_custom_call.1} parent=1 // pred_fallthru
      _
    // Predicated region
    $region10: #{tpu_custom_call.1} parent=1 // pred_check
      _
    $region11: #{tpu_custom_call.1} parent=1 // pred_check_branch
      %23 = sbr.rel (0) target = $region13
    $region12: #{tpu_custom_call.1} parent=1 // pred_region
      _
    $region13: #{tpu_custom_call.1} parent=1 // pred_fallthru
      _
    // Predicated region
    $region14: #{tpu_custom_call.1} parent=1 // pred_check
      _
    $region15: #{tpu_custom_call.1} parent=1 // pred_check_branch
      %25 = sbr.rel (0) target = $region17
    $region16: #{tpu_custom_call.1} parent=1 // pred_region
      _
    $region17: #{tpu_custom_call.1} parent=1 // pred_fallthru
      _
    // Predicated region
    $region18: #{tpu_custom_call.1} parent=1 // pred_check
      _
    $region19: #{tpu_custom_call.1} parent=1 // pred_check_branch
      %27 = sbr.rel (0) target = $region21
    $region20: #{tpu_custom_call.1} parent=1 // pred_region
      _
    $region21: #{tpu_custom_call.1} parent=1 // pred_fallthru
      _
    // Predicated region
    $region22: #{tpu_custom_call.1} parent=1 // pred_check
      _
    $region23: #{tpu_custom_call.1} parent=1 // pred_check_branch
      %29 = sbr.rel (0) target = $region25
    $region24: #{tpu_custom_call.1} parent=1 // pred_region
      _
    $region25: #{tpu_custom_call.1} parent=1 // pred_fallthru
      _
    // Predicated region
    $region26: #{tpu_custom_call.1} parent=1 // pred_check
      _
    $region27: #{tpu_custom_call.1} parent=1 // pred_check_branch
      %31 = sbr.rel (0) target = $region29
    $region28: #{tpu_custom_call.1} parent=1 // pred_region
      _
    $region29: #{tpu_custom_call.1} parent=1 // pred_fallthru
      _
    // Predicated region
    $region30: #{tpu_custom_call.1} parent=1 // pred_check
      _
    $region31: #{tpu_custom_call.1} parent=1 // pred_check_branch
      %33 = sbr.rel (0) target = $region33
    $region32: #{tpu_custom_call.1} parent=1 // pred_region
      _
    $region33: #{tpu_custom_call.1} parent=1 // pred_fallthru
      _
    // Predicated region
    $region34: #{tpu_custom_call.1} parent=1 // pred_check
      _
    $region35: #{tpu_custom_call.1} parent=1 // pred_check_branch
      %35 = sbr.rel (0) target = $region37
    $region36: #{tpu_custom_call.1} parent=1 // pred_region
      _
    $region37: #{tpu_custom_call.1} parent=1 // pred_fallthru
      _
    // Predicated region
    $region38: #{tpu_custom_call.1} parent=1 // pred_check
      _
    $region39: #{tpu_custom_call.1} parent=1 // pred_check_branch
      %37 = sbr.rel (0) target = $region41
    $region40: #{tpu_custom_call.1} parent=1 // pred_region
      _
    $region41: #{tpu_custom_call.1} parent=1 // pred_fallthru
      _
    %v38 = vld [vmem:[%s1] sm:$0x1]
    %v39 = vld [vmem:[%s0] sm:$0x3]
    %v40 = vld [vmem:[%s2] sm:$0xff]
    %v41 = vld [vmem:[%s2 + $0x8] sm:$0xff]
    %v42 = vld [vmem:[%s2 + $0x10] sm:$0xff]
    %v43 = vld [vmem:[%s2 + $0x18] sm:$0xff]
    %v44 = vld [vmem:[%s3] sm:$0xff]
    %v45 = vld [vmem:[%s3 + $0x8] sm:$0xff]
    %v46 = vld [vmem:[%s3 + $0x10] sm:$0xff]
    %v47 = vld [vmem:[%s3 + $0x18] sm:$0xff]
    %49 = vset.pattern.permute.xlu0 0
    %50 = vperm.xlu0 %49, %v44
    %v51 = vpop.permute.xlu0 %50
    %54 = vset.pattern.permute.xlu0 0
    %55 = vperm.xlu0 %54, %v45
    %v56 = vpop.permute.xlu0 %55
    %59 = vset.pattern.permute.xlu0 0
    %60 = vperm.xlu0 %59, %v46
    %v61 = vpop.permute.xlu0 %60
    %64 = vset.pattern.permute.xlu0 0
    %65 = vperm.xlu0 %64, %v47
    %v66 = vpop.permute.xlu0 %65
    %v69 = vlaneseq
    %v70 = vshrl.u32 %v69, 7
    %v71 = vsub.s32 0, %v70
    %v72 = vrot.slane %v38, %v71
    %v74 = vmul.f32 %v51, %v72
    %v75 = vmul.f32 %v56, %v72
    %v76 = vmul.f32 %v61, %v72
    %v77 = vmul.f32 %v66, %v72
    %vm78 = vcmask 64512
    %v80 = vsel %vm78, %v40, 0
    %v83 = vsel %vm78, %v41, 0
    %v86 = vsel %vm78, %v42, 0
    %v89 = vsel %vm78, %v43, 0
    %v92 = vsel %vm78, %v39, 0
    %94 = vmatprep.subr.mxu0 0.0
    %95 = vmatpush1.xpose.msra.mxu0 %v92
    %96 = vmatprep.subr.mxu0 0.0
    %97 = vmatpush1.xpose.msra.mxu0 0.0
    %98 = vmatprep.subr.mxu0 0.0
    %99 = vmatpush1.xpose.msra.mxu0 0.0
    %100 = vmatprep.subr.mxu0 0.0
    %101 = vmatpush1.xpose.msra.mxu0 0.0
    %102 = vmatprep.subr.mxu0 0.0
    %103 = vmatpush1.xpose.msra.mxu0 0.0
    %104 = vmatprep.subr.mxu0 0.0
    %105 = vmatpush1.xpose.msra.mxu0 0.0
    %106 = vmatprep.subr.mxu0 0.0
    %107 = vmatpush1.xpose.msra.mxu0 0.0
    %108 = vmatprep.subr.mxu0 0.0
    %109 = vmatpush1.xpose.msra.mxu0 0.0
    %110 = vmatprep.subr.mxu0 0.0
    %111 = vmatpush1.xpose.msra.mxu0 0.0
    %112 = vmatprep.subr.mxu0 0.0
    %113 = vmatpush1.xpose.msra.mxu0 0.0
    %114 = vmatprep.subr.mxu0 0.0
    %115 = vmatpush1.xpose.msra.mxu0 0.0
    %116 = vmatprep.subr.mxu0 0.0
    %117 = vmatpush1.xpose.msra.mxu0 0.0
    %118 = vmatprep.subr.mxu0 0.0
    %119 = vmatpush1.xpose.msra.mxu0 0.0
    %120 = vmatprep.subr.mxu0 0.0
    %121 = vmatpush1.xpose.msra.mxu0 0.0
    %122 = vmatprep.subr.mxu0 0.0
    %123 = vmatpush1.xpose.msra.mxu0 0.0
    %124 = vmatprep.subr.mxu0 0.0
    %125 = vmatpush1.xpose.msra.mxu0 0.0
    %126 = vmatprep.subr.mxu0 0.0
    %127 = vmatpush1.xpose.msra.mxu0 0.0
    %128 = vmatprep.subr.mxu0 0.0
    %129 = vmatpush1.xpose.msra.mxu0 0.0
    %130 = vmatprep.subr.mxu0 0.0
    %131 = vmatpush1.xpose.msra.mxu0 0.0
    %132 = vmatprep.subr.mxu0 0.0
    %133 = vmatpush1.xpose.msra.mxu0 0.0
    %134 = vmatprep.subr.mxu0 0.0
    %135 = vmatpush1.xpose.msra.mxu0 0.0
    %136 = vmatprep.subr.mxu0 0.0
    %137 = vmatpush1.xpose.msra.mxu0 0.0
    %138 = vmatprep.subr.mxu0 0.0
    %139 = vmatpush1.xpose.msra.mxu0 0.0
    %140 = vmatprep.subr.mxu0 0.0
    %141 = vmatpush1.xpose.msra.mxu0 0.0
    %142 = vmatprep.subr.mxu0 0.0
    %143 = vmatpush1.xpose.msra.mxu0 0.0
    %144 = vmatprep.subr.mxu0 0.0
    %145 = vmatpush1.xpose.msra.mxu0 0.0
    %146 = vmatprep.subr.mxu0 0.0
    %147 = vmatpush1.xpose.msra.mxu0 0.0
    %148 = vmatprep.subr.mxu0 0.0
    %149 = vmatpush1.xpose.msra.mxu0 0.0
    %150 = vmatprep.subr.mxu0 0.0
    %151 = vmatpush1.xpose.msra.mxu0 0.0
    %152 = vmatprep.subr.mxu0 0.0
    %153 = vmatpush1.xpose.msra.mxu0 0.0
    %154 = vmatprep.subr.mxu0 0.0
    %155 = vmatpush1.xpose.msra.mxu0 0.0
    %156 = vmatprep.subr.mxu0 0.0
    %157 = vmatpush1.xpose.msra.mxu0 0.0
    %158 = vmatprep.mubr.f32.mxu0 0.0
    %159 = vmatmul.mubr.f32.gmra.mrb[0].mxu0 %v80
    %v160 = vpop.f32.mrb[0].mxu0
    %v161 = vadd.f32 %v74, %v160
    %v162 = vpop.f32.mrb[0].mxu0
    %163 = vmatprep.mubr.f32.mxu0 0.0
    %164 = vmatmul.mubr.f32.gmra.mrb[0].mxu0 %v83
    %v165 = vpop.f32.mrb[0].mxu0
    %v166 = vadd.f32 %v75, %v165
    %v167 = vpop.f32.mrb[0].mxu0
    %168 = vmatprep.mubr.f32.mxu0 0.0
    %169 = vmatmul.mubr.f32.gmra.mrb[0].mxu0 %v86
    %v170 = vpop.f32.mrb[0].mxu0
    %v171 = vadd.f32 %v76, %v170
    %v172 = vpop.f32.mrb[0].mxu0
    %173 = vmatprep.mubr.f32.mxu0 0.0
    %174 = vmatmul.mubr.f32.gmra.mrb[0].mxu0 %v89
    %v175 = vpop.f32.mrb[0].mxu0
    %v176 = vadd.f32 %v77, %v175
    %v177 = vpop.f32.mrb[0].mxu0
    %178 = vdwg.mxu0
    %v179 = vld [vmem:[%s4] sm:$0xff]
    %v180 = vld [vmem:[%s4 + $0x8] sm:$0xff]
    %v181 = vld [vmem:[%s4 + $0x10] sm:$0xff]
    %v182 = vld [vmem:[%s4 + $0x18] sm:$0xff]
    %184 = vset.pattern.permute.xlu0 0
    %185 = vperm.xlu0 %184, %v179
    %v186 = vpop.permute.xlu0 %185
    %189 = vset.pattern.permute.xlu0 0
    %190 = vperm.xlu0 %189, %v180
    %v191 = vpop.permute.xlu0 %190
    %194 = vset.pattern.permute.xlu0 0
    %195 = vperm.xlu0 %194, %v181
    %v196 = vpop.permute.xlu0 %195
    %199 = vset.pattern.permute.xlu0 0
    %200 = vperm.xlu0 %199, %v182
    %v201 = vpop.permute.xlu0 %200
    %v203 = vadd.f32 %v161, %v186
    %v204 = vadd.f32 %v166, %v191
    %v205 = vadd.f32 %v171, %v196
    %v206 = vadd.f32 %v176, %v201
    %v207 = vtanh.pop %v203
    %v208 = vtanh.pop %v204
    %v209 = vtanh.pop %v205
    %v210 = vtanh.pop %v206
    %v211 = vld [vmem:[%s5] sm:$0xff]
    %v212 = vld [vmem:[%s5 + $0x8] sm:$0xff]
    %v213 = vld [vmem:[%s5 + $0x10] sm:$0xff]
    %v214 = vld [vmem:[%s5 + $0x18] sm:$0xff]
    %v215 = vld [vmem:[%s6] sm:$0xff]
    %v216 = vld [vmem:[%s6 + $0x8] sm:$0xff]
    %v217 = vld [vmem:[%s6 + $0x10] sm:$0xff]
    %v218 = vld [vmem:[%s6 + $0x18] sm:$0xff]
    %220 = vset.pattern.permute.xlu0 0
    %221 = vperm.xlu0 %220, %v215
    %v222 = vpop.permute.xlu0 %221
    %225 = vset.pattern.permute.xlu0 0
    %226 = vperm.xlu0 %225, %v216
    %v227 = vpop.permute.xlu0 %226
    %230 = vset.pattern.permute.xlu0 0
    %231 = vperm.xlu0 %230, %v217
    %v232 = vpop.permute.xlu0 %231
    %235 = vset.pattern.permute.xlu0 0
    %236 = vperm.xlu0 %235, %v218
    %v237 = vpop.permute.xlu0 %236
    %v239 = vmul.f32 %v222, %v72
    %v240 = vmul.f32 %v227, %v72
    %v241 = vmul.f32 %v232, %v72
    %v242 = vmul.f32 %v237, %v72
    %vm243 = vcmask 261120
    %v245 = vsel %vm243, %v211, 0
    %v248 = vsel %vm243, %v212, 0
    %v251 = vsel %vm243, %v213, 0
    %v254 = vsel %vm243, %v214, 0
    %256 = vmatprep.subr.mxu0 0.0
    %257 = vmatpush1.msra.mxu0 %v207
    %258 = vmatprep.subr.mxu0 0.0
    %259 = vmatpush1.msra.mxu0 %v208
    %260 = vmatprep.subr.mxu0 0.0
    %261 = vmatpush1.msra.mxu0 %v209
    %262 = vmatprep.subr.mxu0 0.0
    %263 = vmatpush1.msra.mxu0 %v210
    %264 = vmatprep.subr.mxu0 0.0
    %265 = vmatpush1.msra.mxu0 0.0
    %266 = vmatprep.subr.mxu0 0.0
    %267 = vmatpush1.msra.mxu0 0.0
    %268 = vmatprep.subr.mxu0 0.0
    %269 = vmatpush1.msra.mxu0 0.0
    %270 = vmatprep.subr.mxu0 0.0
    %271 = vmatpush1.msra.mxu0 0.0
    %272 = vmatprep.subr.mxu0 0.0
    %273 = vmatpush1.msra.mxu0 0.0
    %274 = vmatprep.subr.mxu0 0.0
    %275 = vmatpush1.msra.mxu0 0.0
    %276 = vmatprep.subr.mxu0 0.0
    %277 = vmatpush1.msra.mxu0 0.0
    %278 = vmatprep.subr.mxu0 0.0
    %279 = vmatpush1.msra.mxu0 0.0
    %280 = vmatprep.subr.mxu0 0.0
    %281 = vmatpush1.msra.mxu0 0.0
    %282 = vmatprep.subr.mxu0 0.0
    %283 = vmatpush1.msra.mxu0 0.0
    %284 = vmatprep.subr.mxu0 0.0
    %285 = vmatpush1.msra.mxu0 0.0
    %286 = vmatprep.subr.mxu0 0.0
    %287 = vmatpush1.msra.mxu0 0.0
    %288 = vmatprep.subr.mxu0 0.0
    %289 = vmatpush1.msra.mxu0 0.0
    %290 = vmatprep.subr.mxu0 0.0
    %291 = vmatpush1.msra.mxu0 0.0
    %292 = vmatprep.subr.mxu0 0.0
    %293 = vmatpush1.msra.mxu0 0.0
    %294 = vmatprep.subr.mxu0 0.0
    %295 = vmatpush1.msra.mxu0 0.0
    %296 = vmatprep.subr.mxu0 0.0
    %297 = vmatpush1.msra.mxu0 0.0
    %298 = vmatprep.subr.mxu0 0.0
    %299 = vmatpush1.msra.mxu0 0.0
    %300 = vmatprep.subr.mxu0 0.0
    %301 = vmatpush1.msra.mxu0 0.0
    %302 = vmatprep.subr.mxu0 0.0
    %303 = vmatpush1.msra.mxu0 0.0
    %304 = vmatprep.subr.mxu0 0.0
    %305 = vmatpush1.msra.mxu0 0.0
    %306 = vmatprep.subr.mxu0 0.0
    %307 = vmatpush1.msra.mxu0 0.0
    %308 = vmatprep.subr.mxu0 0.0
    %309 = vmatpush1.msra.mxu0 0.0
    %310 = vmatprep.subr.mxu0 0.0
    %311 = vmatpush1.msra.mxu0 0.0
    %312 = vmatprep.subr.mxu0 0.0
    %313 = vmatpush1.msra.mxu0 0.0
    %314 = vmatprep.subr.mxu0 0.0
    %315 = vmatpush1.msra.mxu0 0.0
    %316 = vmatprep.subr.mxu0 0.0
    %317 = vmatpush1.msra.mxu0 0.0
    %318 = vmatprep.subr.mxu0 0.0
    %319 = vmatpush1.msra.mxu0 0.0
    %320 = vmatprep.mubr.f32.mxu0 0.0
    %321 = vmatmul.mubr.f32.gmra.mrb[0].mxu0 %v245
    %v322 = vpop.f32.mrb[0].mxu0
    %v323 = vadd.f32 %v239, %v322
    %v324 = vpop.f32.mrb[0].mxu0
    %325 = vmatprep.mubr.f32.mxu0 0.0
    %326 = vmatmul.mubr.f32.gmra.mrb[0].mxu0 %v248
    %v327 = vpop.f32.mrb[0].mxu0
    %v328 = vadd.f32 %v240, %v327
    %v329 = vpop.f32.mrb[0].mxu0
    %330 = vmatprep.mubr.f32.mxu0 0.0
    %331 = vmatmul.mubr.f32.gmra.mrb[0].mxu0 %v251
    %v332 = vpop.f32.mrb[0].mxu0
    %v333 = vadd.f32 %v241, %v332
    %v334 = vpop.f32.mrb[0].mxu0
    %335 = vmatprep.mubr.f32.mxu0 0.0
    %336 = vmatmul.mubr.f32.gmra.mrb[0].mxu0 %v254
    %v337 = vpop.f32.mrb[0].mxu0
    %v338 = vadd.f32 %v242, %v337
    %v339 = vpop.f32.mrb[0].mxu0
    %340 = vdwg.mxu0
    %v341 = vld [vmem:[%s7] sm:$0xff]
    %v342 = vld [vmem:[%s7 + $0x8] sm:$0xff]
    %v343 = vld [vmem:[%s7 + $0x10] sm:$0xff]
    %v344 = vld [vmem:[%s7 + $0x18] sm:$0xff]
    %346 = vset.pattern.permute.xlu0 0
    %347 = vperm.xlu0 %346, %v341
    %v348 = vpop.permute.xlu0 %347
    %351 = vset.pattern.permute.xlu0 0
    %352 = vperm.xlu0 %351, %v342
    %v353 = vpop.permute.xlu0 %352
    %356 = vset.pattern.permute.xlu0 0
    %357 = vperm.xlu0 %356, %v343
    %v358 = vpop.permute.xlu0 %357
    %361 = vset.pattern.permute.xlu0 0
    %362 = vperm.xlu0 %361, %v344
    %v363 = vpop.permute.xlu0 %362
    %v365 = vadd.f32 %v323, %v348
    %v366 = vadd.f32 %v328, %v353
    %v367 = vadd.f32 %v333, %v358
    %v368 = vadd.f32 %v338, %v363
    %v369 = vtanh.pop %v365
    %v370 = vtanh.pop %v366
    %v371 = vtanh.pop %v367
    %v372 = vtanh.pop %v368
    %v373 = vld [vmem:[%s8] sm:$0xff]
    %v374 = vld [vmem:[%s8 + $0x8] sm:$0xff]
    %v375 = vld [vmem:[%s8 + $0x10] sm:$0xff]
    %v376 = vld [vmem:[%s8 + $0x18] sm:$0xff]
    %378 = vset.pattern.permute.xlu0 0
    %379 = vperm.xlu0 %378, %v373
    %v380 = vpop.permute.xlu0 %379
    %383 = vset.pattern.permute.xlu0 0
    %384 = vperm.xlu0 %383, %v374
    %v385 = vpop.permute.xlu0 %384
    %388 = vset.pattern.permute.xlu0 0
    %389 = vperm.xlu0 %388, %v375
    %v390 = vpop.permute.xlu0 %389
    %393 = vset.pattern.permute.xlu0 0
    %394 = vperm.xlu0 %393, %v376
    %v395 = vpop.permute.xlu0 %394
    %v397 = vmul.f32 %v369, %v380
    %v398 = vmul.f32 %v370, %v385
    %v399 = vmul.f32 %v371, %v390
    %v400 = vmul.f32 %v372, %v395
    %vm401 = vcmask 15360
    %v402 = vsel %vm401, %v397, 0.0
    %v403 = vsel %vm401, %v398, 0.0
    %v404 = vadd.f32 %v402, %v403
    %v405 = vsel %vm401, %v399, 0.0
    %v406 = vadd.f32 %v404, %v405
    %v407 = vsel %vm401, %v400, 0.0
    %v408 = vadd.f32 %v406, %v407
    %v409 = vrot.slane %v408, 4
    %v410 = vadd.f32 %v408, %v409
    %v411 = vrot.slane %v410, 2
    %v412 = vadd.f32 %v410, %v411
    %v413 = vrot.slane %v412, 1
    %v414 = vadd.f32 %v412, %v413
    %v415 = vld [vmem:[#allocation2] sm:$0x1]
    %417 = vset.pattern.permute.xlu0 0
    %418 = vperm.xlu0 %417, %v415
    %v419 = vpop.permute.xlu0 %418
    %v421 = vlaneseq
    %v422 = vshrl.u32 %v421, 7
    %v423 = vsub.s32 0, %v422
    %v424 = vrot.slane %v419, %v423
    %v425 = vadd.f32 %v414, %v424
    %v426 = vmul.f32 %v425, 0.5
    %v427 = vtanh.pop %v426
    %v428 = vmul.f32 %v427, 0.5
    %v429 = vadd.f32 %v428, 0.5
    %vm430 = vcmask 8192
    %431 = vst.msk [vmem:[#allocation3] sm:$0x1] %vm430, %v429
    // Predicated region
    $region42: #{tpu_custom_call.1} parent=1 // pred_check
      _
    $region43: #{tpu_custom_call.1} parent=1 // pred_check_branch
      %433 = sbr.rel (0) target = $region45
    $region44: #{tpu_custom_call.1} parent=1 // pred_region
      %s435 = ssub.s32 16, 16
      %436 = vsyncadd [#allocation4], %s435
      %s438 = sshll.u32 [#allocation3], 4
      %s439 = int_to_ptr.vmem [resolvable:$true] %s438
      %441 = dma.vmem_to_hbm [thread:$0]  %s439, 16, %s10, [#allocation4]
    $region45: #{tpu_custom_call.1} parent=1 // pred_fallthru
      _
    // Predicated region
    $region46: #{tpu_custom_call.1} parent=1 // pred_check
      _
    $region47: #{tpu_custom_call.1} parent=1 // pred_check_branch
      %443 = sbr.rel (0) target = $region49
    $region48: #{tpu_custom_call.1} parent=1 // pred_region
      %444 = dma.done [#allocation4], 16
    $region49: #{tpu_custom_call.1} parent=1 // pred_fallthru
      _
    %445 = vsyncpa [#allocation4], 1

</llo_original>
